<compile_context>
chip_gen: v5e
topology: v5e:2x2
jax: 0.10.0
libtpu: 0.0.40
codegen_flags: <defaults>
</compile_context>

<pallas_src>
import math

import jax
import jax.numpy as jnp
from jax import lax
from jax.experimental import pallas as pl
from jax.experimental.pallas import tpu as pltpu


# ----------------------------------------------------------------------------
# Pallas kernel: one lane-dense tile of  W_x @ X_col  + per-position bias map
# ----------------------------------------------------------------------------
def _matmul_bias_kernel(w_ref, x_ref, bmap_ref, o_ref):
    # w_ref   : (out_c, K)    bf16   (K = in_c * k, resident across the grid)
    # x_ref   : (K, TN)       bf16   im2col tile, batch folded into lanes
    # bmap_ref: (out_c, TN)   f32    precomputed pos/len conv + bias
    # o_ref   : (out_c, TN)   f32
    o_ref[...] = jnp.dot(w_ref[...], x_ref[...],
                         preferred_element_type=jnp.float32) + bmap_ref[...]


def conv1d_im2col_pallas(w_x, x_col, bias_map_tiled, *, tn: int):
    """w_x: (out_c, K) bf16; x_col: (K, N_pad) bf16; bias_map_tiled: (out_c, N_pad) f32."""
    out_c, K = w_x.shape
    _, n_pad = x_col.shape
    grid = (n_pad // tn,)
    return pl.pallas_call(
        _matmul_bias_kernel,
        out_shape=jax.ShapeDtypeStruct((out_c, n_pad), jnp.float32),
        grid=grid,
        in_specs=[
            pl.BlockSpec((out_c, K), lambda n: (0, 0)),
            pl.BlockSpec((K, tn), lambda n: (0, n)),
            pl.BlockSpec((out_c, tn), lambda n: (0, n)),
        ],
        out_specs=pl.BlockSpec((out_c, tn), lambda n: (0, n)),
        compiler_params=pltpu.CompilerParams(
            dimension_semantics=("parallel",)),
    )(w_x, x_col, bias_map_tiled)


# ----------------------------------------------------------------------------
# Module glue (parameter setup + forward), matching PyTorch semantics
# ----------------------------------------------------------------------------
def make_pos_enc(max_length: int, embed_dim: int):
    """Returns pos_enc of shape (1, embed_dim, max_length + 1), f32."""
    position = jnp.arange(max_length + 1, dtype=jnp.float32)[:, None]
    div_term = jnp.exp(
        jnp.arange(0, embed_dim, 2, dtype=jnp.float32)
        * -(math.log(10000.0) / embed_dim))
    ang = position * div_term                                # (L+1, D/2)
    pe = jnp.zeros((max_length + 1, embed_dim), jnp.float32)
    pe = pe.at[:, 0::2].set(jnp.sin(ang))
    pe = pe.at[:, 1::2].set(jnp.cos(ang))
    return pe.T[None]                                        # (1, D, L+1)


def init_params(key, in_c, out_c, embed_dim, k):
    c_total = in_c + 2 * embed_dim
    kw, kb = jax.random.split(key)
    bound = 1.0 / math.sqrt(c_total * k)                     # PyTorch Conv1d default range
    weight = jax.random.uniform(kw, (out_c, c_total, k), jnp.float32,
                                minval=-bound, maxval=bound)
    bias = jax.random.uniform(kb, (out_c,), jnp.float32,
                              minval=-bound, maxval=bound)
    return weight, bias


def pos_length_encoder_forward(x, pos_enc, weight, bias, *,
                               k: int = 3, s: int = 1, p: int = 1):
    """x: (B, in_c, L) f32 -> (B, out_c, l_out) f32."""
    B, in_c, L = x.shape
    out_c, c_total, kk = weight.shape
    D = pos_enc.shape[1]
    max_length = pos_enc.shape[2] - 1
    assert L <= max_length, f"L={L} exceeds max_length={max_length}"
    assert kk == k and c_total == in_c + 2 * D

    l_out = (L + 2 * p - k) // s + 1
    N = B * l_out

    # ---- Batch-independent part: conv over [len_embed; pos_embed] + bias ----
    # Same for every batch element, so compute once (tiny lax conv, f32).
    len_embed = jnp.broadcast_to(pos_enc[:, :, L][:, :, None], (1, D, L))
    pos_embed = pos_enc[:, :, :L]
    emb = jnp.concatenate([len_embed, pos_embed], axis=1)            # (1, 2D, L)
    w_emb = weight[:, in_c:, :]                                      # (out_c, 2D, k)
    bias_map = lax.conv_general_dilated(
        emb, w_emb, window_strides=(s,), padding=[(p, p)],
        dimension_numbers=("NCH", "OIH", "NCH"),
        precision=lax.Precision.HIGHEST)[0] + bias[:, None]          # (out_c, l_out)

    # ---- Batch-dependent part: im2col over the real in_c channels ----------
    x_pad = jnp.pad(x, ((0, 0), (0, 0), (p, p)))                     # halo only, in_c channels
    taps = [x_pad[:, :, t: t + s * (l_out - 1) + 1: s] for t in range(k)]
    x_taps = jnp.stack(taps, axis=2)                                 # (B, in_c, k, l_out)
    x_col = jnp.transpose(x_taps, (1, 2, 0, 3)).reshape(in_c * k, N)  # K-order = (c, t)

    w_x = weight[:, :in_c, :].reshape(out_c, in_c * k)               # same (c, t) K-order

    # ---- Lane-dense padding / tiling of the N = B*l_out axis ----------------
    tn = min(512, pl.cdiv(N, 128) * 128)      # 128-aligned, capped for VMEM (v7x-safe)
    n_pad = pl.cdiv(N, tn) * tn
    x_col = jnp.pad(x_col, ((0, 0), (0, n_pad - N))).astype(jnp.bfloat16)
    bmap_tiled = jnp.pad(jnp.tile(bias_map, (1, B)), ((0, 0), (0, n_pad - N)))

    out_flat = conv1d_im2col_pallas(w_x.astype(jnp.bfloat16), x_col,
                                    bmap_tiled, tn=tn)               # (out_c, n_pad)
    out = out_flat[:, :N].reshape(out_c, B, l_out)
    return jnp.transpose(out, (1, 0, 2))                             # (B, out_c, l_out)


# ----------------------------------------------------------------------------
if __name__ == "__main__":
    # Small, module-consistent shapes.
    B, in_c, out_c = 2, 4, 8
    max_length, embed_dim = 16, 8
    L, k, s, p = 8, 3, 1, 1

    key = jax.random.PRNGKey(0)
    kx, kp = jax.random.split(key)
    x = jax.random.normal(kx, (B, in_c, L), jnp.float32)

    pos_enc = make_pos_enc(max_length, embed_dim)
    weight, bias = init_params(kp, in_c, out_c, embed_dim, k)

    out = pos_length_encoder_forward(x, pos_enc, weight, bias, k=k, s=s, p=p)
    out = jax.block_until_ready(out)

    # Pure-JAX reference check of the whole forward pass (full concat conv).
    D = pos_enc.shape[1]
    len_embed = jnp.broadcast_to(pos_enc[:, :, L][:, :, None], (B, D, L))
    pos_embed = jnp.broadcast_to(pos_enc[:, :, :L], (B, D, L))
    x_cat = jnp.concatenate([x, len_embed, pos_embed], axis=1)
    ref = lax.conv_general_dilated(
        x_cat, weight, window_strides=(s,), padding=[(p, p)],
        dimension_numbers=("NCH", "OIH", "NCH"),
        precision=lax.Precision.HIGHEST) + bias[None, :, None]

    l_out = (L + 2 * p - k) // s + 1
    assert out.shape == (B, out_c, l_out), out.shape
    assert jnp.allclose(out, ref, rtol=2e-2, atol=2e-2), \
        float(jnp.max(jnp.abs(out - ref)))
    print("KERNEL_OK")
</pallas_src>

<mosaic_0001>
module attributes {stable_mosaic.version = 11 : i64} {
  func.func @_matmul_bias_kernel(%arg0: i32, %arg1: memref<8x12xbf16, #tpu.memory_space<vmem>>, %arg2: memref<12x128xbf16, #tpu.memory_space<vmem>>, %arg3: memref<8x128xf32, #tpu.memory_space<vmem>>, %arg4: memref<8x128xf32, #tpu.memory_space<vmem>>) attributes {dimension_semantics = [#tpu.dimension_semantics<parallel>], iteration_bounds = array<i64: 1>, scalar_prefetch = 0 : i64, scratch_operands = 0 : i64, tpu.core_type = #tpu.core_type<tc>, window_params = [{pipeline_mode = #tpu.pipeline_mode<synchronous>, transform_indices = @transform_0, window_bounds = array<i64: 8, 12>}, {transform_indices = @transform_1, window_bounds = array<i64: 12, 128>}, {transform_indices = @transform_2, window_bounds = array<i64: 8, 128>}, {transform_indices = @transform_3, window_bounds = array<i64: 8, 128>}]} {
    %c0 = arith.constant 0 : index
    %c0_0 = arith.constant 0 : index
    %0 = vector.load %arg1[%c0, %c0_0] : memref<8x12xbf16, #tpu.memory_space<vmem>>, vector<8x12xbf16>
    %c0_1 = arith.constant 0 : index
    %c0_2 = arith.constant 0 : index
    %1 = vector.load %arg2[%c0_1, %c0_2] : memref<12x128xbf16, #tpu.memory_space<vmem>>, vector<12x128xbf16>
    %cst = arith.constant dense<0.000000e+00> : vector<8x128xf32>
    %2 = tpu.matmul %0, %1, %cst {dimension_numbers = #tpu.dot_dimension_numbers<[1], [0], [0], [1], [0, 0, 1, 1], [], []>} : vector<8x12xbf16>, vector<12x128xbf16>, vector<8x128xf32> -> vector<8x128xf32>
    %c0_3 = arith.constant 0 : index
    %c0_4 = arith.constant 0 : index
    %3 = vector.load %arg3[%c0_3, %c0_4] : memref<8x128xf32, #tpu.memory_space<vmem>>, vector<8x128xf32>
    %4 = arith.addf %2, %3 : vector<8x128xf32>
    %c0_5 = arith.constant 0 : index
    %c0_6 = arith.constant 0 : index
    %5 = vector.load %arg4[%c0_5, %c0_6] : memref<8x128xf32, #tpu.memory_space<vmem>>, vector<8x128xf32>
    tpu.vector_store %arg4[%c0_5, %c0_6], %4 {strides = array<i32>} : memref<8x128xf32, #tpu.memory_space<vmem>>, vector<8x128xf32>,
    return
  }
  func.func @transform_0(%arg0: i32) -> (i32, i32) {
    %c0_i32 = arith.constant 0 : i32
    %c0_i32_0 = arith.constant 0 : i32
    %c0_i32_1 = arith.constant 0 : i32
    return %c0_i32, %c0_i32_0 : i32, i32
  }
  func.func @transform_1(%arg0: i32) -> (i32, i32) {
    %c0_i32 = arith.constant 0 : i32
    %c0_i32_0 = arith.constant 0 : i32
    return %c0_i32, %arg0 : i32, i32
  }
  func.func @transform_2(%arg0: i32) -> (i32, i32) {
    %c0_i32 = arith.constant 0 : i32
    %c0_i32_0 = arith.constant 0 : i32
    return %c0_i32, %arg0 : i32, i32
  }
  func.func @transform_3(%arg0: i32) -> (i32, i32) {
    %c0_i32 = arith.constant 0 : i32
    %c0_i32_0 = arith.constant 0 : i32
    return %c0_i32, %arg0 : i32, i32
  }
}

</mosaic_0001>

<llo_original>
// kernel: tpu_custom_call.1
$region0: #{tpu_custom_call.1}
  #allocation0 [shape = 'u32[]', space=smem, size = 0x4, offset = 0x4, fixed_abs, tag = 'smem constant byte address 0x4 - core index']
  #allocation1 [shape = 'u32[72,128]{1,0:T(1,128)}', space=vmem, size = 0x9000, scoped, tag = 'internal scratch']
  %s0 = inlined_call_operand.hbm [shape: bf16[8,12], index: 0, kind: input, shape index: {}]
  %s1 = inlined_call_operand.hbm [shape: bf16[12,128], index: 1, kind: input, shape index: {}]
  %s2 = inlined_call_operand.hbm [shape: f32[8,128], index: 2, kind: input, shape index: {}]
  %s3 = inlined_call_operand.hbm [shape: f32[8,128], index: 3, kind: output, shape index: {}]
  %s4 = sld [smem:[#allocation0]]
  $region34: #{tpu_custom_call.1} parent=0
    _
  %s6 = ssub.s32 1, %s4
  %s7 = scalar_select 0, %s6, %s4
  $region1: #{tpu_custom_call.1} parent=0
    #allocation2 [shape = 'u8[2048]{0}', space=vmem, size = 0x800, scoped, tag = 'input window, operand 0, single buffered']
    #allocation3 [shape = 's32[1]{0}', space=sflag, size = 0x4, scoped, tag = 'scoped memory for tpu_custom_call.1']
    #allocation4 [shape = 's32[1]{0}', space=sflag, size = 0x4, scoped, tag = 'scoped memory for tpu_custom_call.1']
    #allocation5 [shape = 'u8[4096]{0}', space=vmem, size = 0x1000, scoped, tag = 'input window, operand 1, single buffered']
    #allocation6 [shape = 's32[1]{0}', space=sflag, size = 0x4, scoped, tag = 'scoped memory for tpu_custom_call.1']
    #allocation7 [shape = 'u8[4096]{0}', space=vmem, size = 0x1000, scoped, tag = 'input window, operand 2, single buffered']
    #allocation8 [shape = 'u8[4096]{0}', space=vmem, size = 0x1000, scoped, tag = 'output window, operand 0, single buffered']
    %8 = vsyncpa [#allocation3], 0
    %9 = vsyncpa [#allocation6], 0
    %10 = vsyncpa [#allocation4], 0
    // Predicated region
    $region2: #{tpu_custom_call.1} parent=1 // pred_check
      _
    $region3: #{tpu_custom_call.1} parent=1 // pred_check_branch
      %12 = sbr.rel (0) target = $region5
    $region4: #{tpu_custom_call.1} parent=1 // pred_region
      %14 = vsyncadd [#allocation3], 0
      %s16 = sshll.u32 %s0, 4
      %s17 = int_to_ptr.hbm [resolvable:$true] %s16
      %s18 = sshll.u32 [#allocation2], 4
      %s19 = int_to_ptr.vmem [resolvable:$true] %s18
      %21 = dma.hbm_to_vmem [thread:$0]  %s17, 64, %s19, [#allocation3]
    $region5: #{tpu_custom_call.1} parent=1 // pred_fallthru
      _
    // Predicated region
    $region6: #{tpu_custom_call.1} parent=1 // pred_check
      _
    $region7: #{tpu_custom_call.1} parent=1 // pred_check_branch
      %23 = sbr.rel (0) target = $region9
    $region8: #{tpu_custom_call.1} parent=1 // pred_region
      %25 = vsyncadd [#allocation6], 0
      %s26 = sshll.u32 %s1, 4
      %s27 = int_to_ptr.hbm [resolvable:$true] %s26
      %s28 = sshll.u32 [#allocation5], 4
      %s29 = int_to_ptr.vmem [resolvable:$true] %s28
      %34 = dma.hbm_to_vmem [thread:$0]  %s27, 128, %s29, [#allocation6], 64, 64, 4
    $region9: #{tpu_custom_call.1} parent=1 // pred_fallthru
      _
    // Predicated region
    $region10: #{tpu_custom_call.1} parent=1 // pred_check
      _
    $region11: #{tpu_custom_call.1} parent=1 // pred_check_branch
      %36 = sbr.rel (0) target = $region13
    $region12: #{tpu_custom_call.1} parent=1 // pred_region
      %38 = vsyncadd [#allocation6], 0
      %s40 = sshll.u32 %s2, 4
      %s41 = int_to_ptr.hbm [resolvable:$true] %s40
      %s42 = sshll.u32 [#allocation7], 4
      %s43 = int_to_ptr.vmem [resolvable:$true] %s42
      %45 = dma.hbm_to_vmem [thread:$0]  %s41, 128, %s43, [#allocation6]
    $region13: #{tpu_custom_call.1} parent=1 // pred_fallthru
      _
    // Predicated region
    $region14: #{tpu_custom_call.1} parent=1 // pred_check
      _
    $region15: #{tpu_custom_call.1} parent=1 // pred_check_branch
      %47 = sbr.rel (0) target = $region17
    $region16: #{tpu_custom_call.1} parent=1 // pred_region
      %49 = dma.done [#allocation3], 64
    $region17: #{tpu_custom_call.1} parent=1 // pred_fallthru
      _
    // Predicated region
    $region18: #{tpu_custom_call.1} parent=1 // pred_check
      _
    $region19: #{tpu_custom_call.1} parent=1 // pred_check_branch
      %51 = sbr.rel (0) target = $region21
    $region20: #{tpu_custom_call.1} parent=1 // pred_region
      %53 = dma.done [#allocation6], 128
    $region21: #{tpu_custom_call.1} parent=1 // pred_fallthru
      _
    // Predicated region
    $region22: #{tpu_custom_call.1} parent=1 // pred_check
      _
    $region23: #{tpu_custom_call.1} parent=1 // pred_check_branch
      %55 = sbr.rel (0) target = $region25
    $region24: #{tpu_custom_call.1} parent=1 // pred_region
      %57 = dma.done [#allocation6], 128
    $region25: #{tpu_custom_call.1} parent=1 // pred_fallthru
      _
    %v59 = vld [vmem:[#allocation2] sm:$0xf]
    %v60 = vld [vmem:[#allocation5] sm:$0xf]
    %v61 = vld [vmem:[#allocation5 + $0x4] sm:$0x3]
    %v62 = vld [vmem:[#allocation7] sm:$0xff]
    %v65 = vunpack.c.l.b16 %v60
    %v66 = vunpack.c.l.b16 %v61
    %v67 = vpack.c.b16 %v66, %v65
    %vm68 = vcmask 97280
    %v70 = vsel %vm68, %v59, 0
    %vm72 = vcmask 1045504
    %v74 = vsel %vm72, %v67, 0
    %76 = vmatpush.bf16.msra.mxu0 0
    %77 = vmatpush.bf16.msra.mxu0 0
    %78 = vmatpush.bf16.msra.mxu0 0
    %79 = vmatpush.bf16.msra.mxu0 0
    %80 = vmatpush.bf16.msra.mxu0 0
    %81 = vmatpush.bf16.msra.mxu0 0
    %82 = vmatpush.bf16.msra.mxu0 0
    %83 = vmatpush.bf16.msra.mxu0 %v74
    %84 = vmatmul.bf16.gmra.mxu0 %v70
    %v85 = vpop.f32.mrf.mxu0
    %v86 = vadd.f32 %v62, %v85
    %v87 = vpop.f32.mrf.mxu0
    %88 = vdwg.mxu0
    %89 = vst [vmem:[#allocation8] sm:$0xff] %v86
    // Predicated region
    $region26: #{tpu_custom_call.1} parent=1 // pred_check
      _
    $region27: #{tpu_custom_call.1} parent=1 // pred_check_branch
      %91 = sbr.rel (0) target = $region29
    $region28: #{tpu_custom_call.1} parent=1 // pred_region
      %93 = vsyncadd [#allocation4], 0
      %s95 = sshll.u32 [#allocation8], 4
      %s96 = int_to_ptr.vmem [resolvable:$true] %s95
      %s97 = sshll.u32 %s3, 4
      %s98 = int_to_ptr.hbm [resolvable:$true] %s97
      %100 = dma.vmem_to_hbm [thread:$0]  %s96, 128, %s98, [#allocation4]
    $region29: #{tpu_custom_call.1} parent=1 // pred_fallthru
      _
    // Predicated region
    $region30: #{tpu_custom_call.1} parent=1 // pred_check
      _
    $region31: #{tpu_custom_call.1} parent=1 // pred_check_branch
      %102 = sbr.rel (0) target = $region33
    $region32: #{tpu_custom_call.1} parent=1 // pred_region
      %104 = dma.done [#allocation4], 128
    $region33: #{tpu_custom_call.1} parent=1 // pred_fallthru
      _
    %105 = vsyncpa [#allocation3], 1
    %106 = vsyncpa [#allocation6], 1
    %107 = vsyncpa [#allocation4], 1

</llo_original>
